<compile_context>
chip_gen: v7x
topology: tpu7x:2x2x1
jax: 0.10.0
libtpu: 0.0.40
codegen_flags: <defaults>
</compile_context>

<pallas_src>
import functools

import jax
import jax.numpy as jnp
from jax import lax
from jax.experimental import pallas as pl
from jax.experimental.pallas import tpu as pltpu


def _round_up(x, m):
    return (x + m - 1) // m * m


def _auto_block_k(K):
    # Small K: one tight tile.  Larger K: 128/256 rows per step (MXU M-dim),
    # preferring 128 when it keeps >= 2 grid steps for v7x's two TensorCores.
    if K <= 128:
        return max(8, _round_up(K, 8))
    if K <= 512:
        return 128
    return 256


def _pad_cast(x, shape, dtype):
    x = x.astype(dtype)
    if tuple(x.shape) == tuple(shape):
        return x                      # skip the pad copy when already aligned
    out = jnp.zeros(shape, dtype)
    return out.at[tuple(slice(0, s) for s in x.shape)].set(x)


def _pick_vmem_limit(needed_bytes):
    cap = 64 * 1024 * 1024            # conservative fallback (v7x per-TC VMEM)
    try:
        cap = int(pltpu.get_tpu_info().vmem_capacity_bytes)
    except Exception:
        pass
    ceiling = (cap * 3) // 4          # leave headroom for the compiler
    want = int(needed_bytes) + 16 * 1024 * 1024
    return int(max(32 * 1024 * 1024, min(want, ceiling)))


# ----------------------------------------------------------------------------
# Fused GraphPool kernel
#   use_gcn=True : refs = (A_hbm, X, W, b, value, out, gather_scratch, sems)
#   use_gcn=False: refs = (X_hbm,          value, out, gather_scratch, sems)
# ----------------------------------------------------------------------------
def _graph_pool_kernel(idx_ref, *refs, block_k, n_chunks, use_gcn):
    if use_gcn:
        src_hbm, x_ref, w_ref, b_ref, val_ref, o_ref, gath, sem = refs
    else:
        src_hbm, val_ref, o_ref, gath, sem = refs

    chunk = block_k // n_chunks
    base = pl.program_id(0) * block_k

    # Phase 1: issue ALL row-gather DMAs for this tile up front.
    # (idx scalars are read from SMEM before any .wait(); DMAs for later
    #  chunks stay in flight while earlier chunks are consumed below.)
    # Padded tail rows (idx==0, value==0) are gathered too; they are zeroed by
    # value and sliced off in the wrapper.
    def _issue_chunk(c):
        row0 = c * chunk

        def body(j, carry):
            r = idx_ref[base + row0 + j]
            pltpu.make_async_copy(
                src_hbm.at[pl.ds(r, 1), :],          # (1, width) row in HBM
                gath.at[pl.ds(row0 + j, 1), :],      # (1, width) row in VMEM
                sem.at[c],
            ).start()
            return carry

        lax.fori_loop(0, chunk, body, 0)

    for c in range(n_chunks):
        _issue_chunk(c)

    if use_gcn:
        x_mat = x_ref[...]     # resident across grid steps (constant index_map)
        w_mat = w_ref[...]
        bias = b_ref[...]

    # Phase 2: per chunk — wait for its rows, then compute & store.  Chunks
    # c+1.. keep DMA-ing while chunk c runs on the MXU (intra-step overlap;
    # no cross-step state, so "parallel"/megacore is safe).
    for c in range(n_chunks):
        row0 = c * chunk

        def wait_body(j, carry, c=c, row0=row0):
            # Dummy descriptor: only its size matters; one wait per started row
            # keeps semaphore accounting exact for any signal granularity.
            pltpu.make_async_copy(
                src_hbm.at[pl.ds(0, 1), :],
                gath.at[pl.ds(row0, 1), :],
                sem.at[c],
            ).wait()
            return carry

        lax.fori_loop(0, chunk, wait_body, 0)

        rows = pl.ds(row0, chunk)                    # static start
        a_sel = gath[rows, :]
        if use_gcn:
            # Pooled rows of down_gcn(A, X): (A[idx] @ X) @ W + b
            # bf16 operands, f32 accumulation on the MXU.
            ax = jnp.dot(a_sel, x_mat, preferred_element_type=jnp.float32)
            y = jnp.dot(ax.astype(jnp.bfloat16), w_mat,
                        preferred_element_type=jnp.float32) + bias
        else:
            y = a_sel                                 # plain gather path (f32)

        o_ref[rows, :] = (y * val_ref[rows, :]).astype(o_ref.dtype)


# ----------------------------------------------------------------------------
# Python wrapper — semantics of GraphPool.forward
#   down_gcn = (W, b) with W stored as (in_dim, out_dim)  <=> GCN(in,out).proj
# ----------------------------------------------------------------------------
def graph_pool(A, X, idx, value, *, down_gcn=None, initlayer=False, block_k=None):
    A = jnp.asarray(A, jnp.float32)
    X = jnp.asarray(X, jnp.float32)
    N, F = X.shape
    K = int(idx.shape[0])

    if block_k is None:
        block_k = _auto_block_k(K)
    block_k = max(8, _round_up(block_k, 8))
    n_chunks = block_k // 64 if (block_k % 64 == 0 and block_k > 64) else 1

    Kpad = _round_up(K, block_k)
    idx_p = jnp.zeros((Kpad,), jnp.int32).at[:K].set(idx.astype(jnp.int32))
    val_p = jnp.zeros((Kpad, 1), jnp.float32).at[:K, 0].set(
        jnp.asarray(value, jnp.float32))

    Fpad = _round_up(F, 128)
    use_gcn = down_gcn is not None

    if use_gcn:
        Npad = _round_up(N, 128)                     # lane-aligned gather width
        Ap = _pad_cast(A, (N, Npad), jnp.bfloat16)   # binary+eye -> exact in bf16
        Xp = _pad_cast(X, (Npad, Fpad), jnp.bfloat16)
        W, b = down_gcn
        W = jnp.asarray(W, jnp.float32)
        b = jnp.asarray(b, jnp.float32)
        Fout = W.shape[1]
        Fout_pad = _round_up(Fout, 128)
        Wp = _pad_cast(W, (Fpad, Fout_pad), jnp.bfloat16)
        bp = _pad_cast(b.reshape(1, -1), (1, Fout_pad), jnp.float32)

        operands = (Ap, Xp, Wp, bp, val_p)
        in_specs = [
            pl.BlockSpec(memory_space=pl.ANY),                       # A in HBM
            pl.BlockSpec((Npad, Fpad), lambda i, idx_ref: (0, 0)),   # X resident
            pl.BlockSpec((Fpad, Fout_pad), lambda i, idx_ref: (0, 0)),
            pl.BlockSpec((1, Fout_pad), lambda i, idx_ref: (0, 0)),
            pl.BlockSpec((block_k, 1), lambda i, idx_ref: (i, 0)),
        ]
        gather_w, gather_dtype = Npad, jnp.bfloat16
        out_w, out_cols = Fout_pad, Fout
        resident_bytes = 2 * (Xp.size * Xp.dtype.itemsize
                              + Wp.size * Wp.dtype.itemsize
                              + bp.size * bp.dtype.itemsize)
    else:
        Xp = _pad_cast(X, (N, Fpad), jnp.float32)
        operands = (Xp, val_p)
        in_specs = [
            pl.BlockSpec(memory_space=pl.ANY),                       # X in HBM
            pl.BlockSpec((block_k, 1), lambda i, idx_ref: (i, 0)),
        ]
        gather_w, gather_dtype = Fpad, jnp.float32
        out_w, out_cols = Fpad, F
        resident_bytes = 0

    gather_bytes = block_k * gather_w * jnp.dtype(gather_dtype).itemsize
    needed = (resident_bytes + gather_bytes
              + 2 * block_k * out_w * 4            # double-buffered output block
              + 2 * block_k * 4)                   # value block
    vmem_limit = _pick_vmem_limit(needed)

    out = pl.pallas_call(
        functools.partial(_graph_pool_kernel, block_k=block_k,
                          n_chunks=n_chunks, use_gcn=use_gcn),
        out_shape=jax.ShapeDtypeStruct((Kpad, out_w), jnp.float32),
        grid_spec=pltpu.PrefetchScalarGridSpec(
            num_scalar_prefetch=1,
            grid=(Kpad // block_k,),
            in_specs=in_specs,
            out_specs=pl.BlockSpec((block_k, out_w), lambda i, idx_ref: (i, 0)),
            scratch_shapes=[
                pltpu.VMEM((block_k, gather_w), gather_dtype),
                pltpu.SemaphoreType.DMA((n_chunks,)),
            ],
        ),
        compiler_params=pltpu.CompilerParams(
            dimension_semantics=("parallel",),
            vmem_limit_bytes=vmem_limit,
        ),
    )(idx_p, *operands)

    new_x = out[:K, :out_cols]
    if initlayer:
        A_new = A[idx, :][:, idx]    # pure indexing, zero FLOPs — plain JAX
        return new_x, A_new
    return new_x


# ----------------------------------------------------------------------------
# Main: deterministic small example + reference check
# ----------------------------------------------------------------------------
if __name__ == "__main__":
    key = jax.random.PRNGKey(0)
    N, in_dim = 16, 32
    K = N // 2

    kA, kx, ksc, kw, kb = jax.random.split(key, 5)
    A_rand = jax.random.uniform(kA, (N, N))
    A = ((A_rand + A_rand.T) > 1.0).astype(jnp.float32) + jnp.eye(N, dtype=jnp.float32)
    X = jax.random.normal(kx, (N, in_dim), dtype=jnp.float32)

    # top-k style idx/value, as produced upstream of GraphPool
    scores = jax.nn.sigmoid(jax.random.normal(ksc, (N,), jnp.float32))
    value_all, idx_all = jax.lax.top_k(scores, N)
    idx = idx_all[:K].astype(jnp.int32)
    value = value_all[:K]

    # down_gcn parameters (== GCN(in_dim, in_dim).proj), W stored as (in, out)
    s = 1.0 / (in_dim ** 0.5)
    W = jax.random.uniform(kw, (in_dim, in_dim), jnp.float32, -s, s)
    b = jax.random.uniform(kb, (in_dim,), jnp.float32, -s, s)

    # Path 1: GraphPool(g=False), initlayer=True -> (new_x, pooled adjacency)
    new_x1, A_pooled = graph_pool(A, X, idx, value, initlayer=True)
    # Path 2: GraphPool(g=True) with down_gcn, initlayer=False -> new_x
    new_x2 = graph_pool(A, X, idx, value, down_gcn=(W, b))
    jax.block_until_ready((new_x1, A_pooled, new_x2))

    # Pure-JAX references (mirror the PyTorch forward, eval-mode dropout).
    ref1 = X[idx, :] * value[:, None]
    ref_Ap = A[idx, :][:, idx]
    # bf16-matched reference for the GCN path (kernel feeds the MXU in bf16
    # with f32 accumulation, same as below).
    Ab = A.astype(jnp.bfloat16)
    Xb = X.astype(jnp.bfloat16)
    Wb = W.astype(jnp.bfloat16)
    AX = jnp.dot(Ab, Xb, preferred_element_type=jnp.float32)
    Xg = jnp.dot(AX.astype(jnp.bfloat16), Wb,
                 preferred_element_type=jnp.float32) + b[None, :]
    ref2 = Xg[idx, :] * value[:, None]

    assert new_x1.shape == (K, in_dim)
    assert new_x2.shape == (K, in_dim)
    assert A_pooled.shape == (K, K)
    assert jnp.all(jnp.isfinite(new_x2))
    assert jnp.allclose(new_x1, ref1, atol=1e-5, rtol=1e-5)
    assert jnp.allclose(A_pooled, ref_Ap)
    assert jnp.allclose(new_x2, ref2, atol=2e-2, rtol=2e-2)
    print("KERNEL_OK")
</pallas_src>

<mosaic_0001>
module attributes {stable_mosaic.version = 11 : i64} {
  func.func @_graph_pool_kernel(%arg0: i32, %arg1: memref<8xi32, #tpu.memory_space<smem>>, %arg2: memref<16x128xf32, #tpu.memory_space<any>>, %arg3: memref<8x1xf32, #tpu.memory_space<vmem>>, %arg4: memref<8x128xf32, #tpu.memory_space<vmem>>, %arg5: memref<8x128xf32, #tpu.memory_space<vmem>>, %arg6: memref<1x!tpu.dma_semaphore, #tpu.memory_space<semaphore_mem>>) attributes {dimension_semantics = [#tpu.dimension_semantics<parallel>], iteration_bounds = array<i64: 1>, scalar_prefetch = 1 : i64, scratch_operands = 2 : i64, tpu.core_type = #tpu.core_type<tc>, window_params = [{}, {transform_indices = @transform_1, window_bounds = array<i64: 8, 1>}, {transform_indices = @transform_2, window_bounds = array<i64: 8, 128>}]} {
    %c8_i32 = arith.constant 8 : i32
    %0 = arith.muli %arg0, %c8_i32 : i32
    %c0_i32 = arith.constant 0 : i32
    %c8_i32_0 = arith.constant 8 : i32
    %1 = arith.addi %c0_i32, %c8_i32_0 : i32
    %c1_i32 = arith.constant 1 : i32
    scf.for %arg7 = %c0_i32 to %1 step %c1_i32  : i32 {
      %c0_i32_10 = arith.constant 0 : i32
      %8 = arith.addi %0, %c0_i32_10 : i32
      %9 = arith.addi %8, %arg7 : i32
      %10 = arith.index_cast %9 : i32 to index
      %11 = memref.load %arg1[%10] : memref<8xi32, #tpu.memory_space<smem>>
      %c0_i32_11 = arith.constant 0 : i32
      %12 = arith.addi %c0_i32_11, %arg7 : i32
      %c0_i32_12 = arith.constant 0 : i32
      %c0_i32_13 = arith.constant 0 : i32
      %13 = tpu.memref_slice %arg2[%11, %c0_i32_13] : memref<16x128xf32, #tpu.memory_space<any>> -> memref<1x128xf32, #tpu.memory_space<any>>
      %c0_i32_14 = arith.constant 0 : i32
      %14 = tpu.memref_slice %arg5[%12, %c0_i32_14] : memref<8x128xf32, #tpu.memory_space<vmem>> -> memref<1x128xf32, #tpu.memory_space<vmem>>
      %15 = tpu.memref_slice %arg6[%c0_i32_12] : memref<1x!tpu.dma_semaphore, #tpu.memory_space<semaphore_mem>> -> memref<1x!tpu.dma_semaphore, #tpu.memory_space<semaphore_mem>>
      %16 = tpu.memref_squeeze %15 : memref<1x!tpu.dma_semaphore, #tpu.memory_space<semaphore_mem>> -> memref<!tpu.dma_semaphore, #tpu.memory_space<semaphore_mem>>
      tpu.enqueue_dma source(%13 : memref<1x128xf32, #tpu.memory_space<any>>) target(%14 : memref<1x128xf32, #tpu.memory_space<vmem>>) target_semaphore(%16 : memref<!tpu.dma_semaphore, #tpu.memory_space<semaphore_mem>>)
    }
    %c8_i32_1 = arith.constant 8 : i32
    %c0_i32_2 = arith.constant 0 : i32
    %c8_i32_3 = arith.constant 8 : i32
    %2 = arith.addi %c0_i32_2, %c8_i32_3 : i32
    %c1_i32_4 = arith.constant 1 : i32
    scf.for %arg7 = %c0_i32_2 to %2 step %c1_i32_4  : i32 {
      %c0_i32_10 = arith.constant 0 : i32
      %c0_i32_11 = arith.constant 0 : i32
      %c0_i32_12 = arith.constant 0 : i32
      %8 = tpu.memref_slice %arg2[%c0_i32_11, %c0_i32_12] : memref<16x128xf32, #tpu.memory_space<any>> -> memref<1x128xf32, #tpu.memory_space<any>>
      %c0_i32_13 = arith.constant 0 : i32
      %c0_i32_14 = arith.constant 0 : i32
      %9 = tpu.memref_slice %arg5[%c0_i32_13, %c0_i32_14] : memref<8x128xf32, #tpu.memory_space<vmem>> -> memref<1x128xf32, #tpu.memory_space<vmem>>
      %10 = tpu.memref_slice %arg6[%c0_i32_10] : memref<1x!tpu.dma_semaphore, #tpu.memory_space<semaphore_mem>> -> memref<1x!tpu.dma_semaphore, #tpu.memory_space<semaphore_mem>>
      %11 = tpu.memref_squeeze %10 : memref<1x!tpu.dma_semaphore, #tpu.memory_space<semaphore_mem>> -> memref<!tpu.dma_semaphore, #tpu.memory_space<semaphore_mem>>
      tpu.wait_dma2 semaphore(%11 : memref<!tpu.dma_semaphore, #tpu.memory_space<semaphore_mem>>) src(%8 : memref<1x128xf32, #tpu.memory_space<any>>) dst(%9 : memref<1x128xf32, #tpu.memory_space<vmem>>)
    }
    %c0 = arith.constant 0 : index
    %c0_5 = arith.constant 0 : index
    %3 = vector.load %arg5[%c0, %c0_5] : memref<8x128xf32, #tpu.memory_space<vmem>>, vector<8x128xf32>
    %c0_6 = arith.constant 0 : index
    %c0_7 = arith.constant 0 : index
    %4 = vector.load %arg3[%c0_6, %c0_7] : memref<8x1xf32, #tpu.memory_space<vmem>>, vector<8x1xf32>
    %5 = vector.broadcast %4 : vector<8x1xf32> to vector<8x128xf32>
    %6 = arith.mulf %3, %5 : vector<8x128xf32>
    %c0_8 = arith.constant 0 : index
    %c0_9 = arith.constant 0 : index
    %7 = vector.load %arg4[%c0_8, %c0_9] : memref<8x128xf32, #tpu.memory_space<vmem>>, vector<8x128xf32>
    tpu.vector_store %arg4[%c0_8, %c0_9], %6 {strides = array<i32>} : memref<8x128xf32, #tpu.memory_space<vmem>>, vector<8x128xf32>,
    return
  }
  func.func @transform_1(%arg0: i32, %arg1: memref<8xi32, #tpu.memory_space<smem>>) -> (i32, i32) {
    %c0_i32 = arith.constant 0 : i32
    %c0_i32_0 = arith.constant 0 : i32
    return %arg0, %c0_i32 : i32, i32
  }
  func.func @transform_2(%arg0: i32, %arg1: memref<8xi32, #tpu.memory_space<smem>>) -> (i32, i32) {
    %c0_i32 = arith.constant 0 : i32
    %c0_i32_0 = arith.constant 0 : i32
    return %arg0, %c0_i32 : i32, i32
  }
}

</mosaic_0001>

<llo_original>
// kernel: tpu_custom_call.1
$region0: #{tpu_custom_call.1}
  #allocation0 [shape = 'u32[]', space=smem, size = 0x4, offset = 0x4, fixed_abs, tag = 'smem constant byte address 0x4 - core index']
  #allocation1 [shape = 'u32[144,128]{1,0:T(1,128)}', space=vmem, size = 0x12000, scoped, tag = 'internal scratch']
  #allocation2 [shape = 'f32[8,128]{1,0:T(8,128)}', space=vmem, size = 0x1000, scoped, tag = 'scratch operand']
  #allocation3 [shape = 's32[1]{0}', space=sflag, size = 0x4, scoped, tag = 'scratch operand']
  #allocation4 [shape = 's32[1]{0}', space=sflag, size = 0x4, scoped, tag = 'scoped memory for tpu_custom_call.1']
  #allocation5 [shape = 'u8[512]{0}', space=smem, size = 0x200, scoped, tag = 'prefetched SMEM operand 0']
  #allocation8 [shape = 's32[]', space=sflag, size = 0x4, offset = 0, fixed_abs, tag = 'sflag constant byte address 0x0 - dummy sync flag']
  #allocation9 [shape = 's32[]', space=sflag, size = 0x4, offset = 0, fixed_abs, tag = 'sflag constant byte address 0x0 - dummy sync flag']
  #allocation10 [shape = 'u32[]', space=smem, size = 0x4, offset = 0x44, fixed_abs, tag = 'smem constant byte address 0x44 - assertion arg 0']
  #allocation11 [shape = 'u32[]', space=smem, size = 0x4, offset = 0x48, fixed_abs, tag = 'smem constant byte address 0x48 - assertion arg 1']
  %s0 = inlined_call_operand.vmem [shape: s32[8], index: 0, kind: input, shape index: {}]
  %s1 = inlined_call_operand.hbm [shape: f32[16,128], index: 1, kind: input, shape index: {}]
  %s2 = inlined_call_operand.vmem [shape: f32[8,1], index: 2, kind: input, shape index: {}]
  %s3 = inlined_call_operand.hbm [shape: f32[8,128], index: 3, kind: output, shape index: {}]
  %s4 = sld [smem:[#allocation0]]
  $region32: #{tpu_custom_call.1} parent=0
    _
  %s6 = ssub.s32 1, %s4
  %s7 = scalar_select 0, %s6, %s4
  %s8 = sshll.u32 %s0, 4
  %s9 = int_to_ptr.vmem [resolvable:$true] %s8
  %11 = dma.vmem_to_smem %s9, 16, [#allocation5], [#allocation4]
  %12 = dma.done [#allocation4], 16
  %13 = sfence
  $region1: #{tpu_custom_call.1} parent=0
    #allocation6 [shape = 'u8[4096]{0}', space=vmem, size = 0x1000, scoped, tag = 'output window, operand 0, single buffered']
    #allocation7 [shape = 's32[1]{0}', space=sflag, size = 0x4, scoped, tag = 'scoped memory for tpu_custom_call.1']
    %14 = vsyncpa [#allocation7], 0
    // Predicated region
    $region2: #{tpu_custom_call.1} parent=1 // pred_check
      _
    $region3: #{tpu_custom_call.1} parent=1 // pred_check_branch
      %16 = sbr.rel (0) target = $region5
    $region4: #{tpu_custom_call.1} parent=1 // pred_region
      _
    $region5: #{tpu_custom_call.1} parent=1 // pred_fallthru
      _
    %s17 = smul.u32 0, 8
    loop: start=0, step=1, limit=8
    $region6: #{tpu_custom_call.1} parent=1 // loop_pre_header
      _
    $region7: #{tpu_custom_call.1} parent=1 // loop_header
      %s19 = sphi 0, %s23
      %p20 = scmp.ge.s32.totalorder %s19, 8
    $region8: #{tpu_custom_call.1} parent=1 // loop_header_branch
      %22 = sbr.rel (%p20) target = $region12
    $region9: #{tpu_custom_call.1} parent=1 // loop_body
      %s24 = sadd.s32 %s17, %s19
      %s25 = sld [smem:[#allocation5 + %s24]]
      %s26 = smul.addr %s25, 16
      %s27 = scalar_lea.hbm %s1, %s26
      %s28 = scalar_lea.vmem [#allocation2], %s19
      // Predicated region
      $region13: #{tpu_custom_call.1} parent=9 // pred_check
        _
      $region14: #{tpu_custom_call.1} parent=9 // pred_check_branch
        %30 = sbr.rel target = $region16
      $region15: #{tpu_custom_call.1} parent=9 // pred_region
        %31 = sst [smem:[#allocation10]] [#allocation9]
        %32 = sst [smem:[#allocation11]] [#allocation8]
      $region16: #{tpu_custom_call.1} parent=9 // pred_fallthru
        _
      %34 = shalt.err (0)
      %s36 = sshll.u32 %s28, 4
      %s37 = int_to_ptr.vmem [resolvable:$true] %s36
      %39 = dma.hbm_to_vmem [thread:$0]  %s27, 16, %s37, [#allocation3]
    $region10: #{tpu_custom_call.1} parent=1 // loop_footer
      %s23 = sadd.s32 1, %s19
    $region11: #{tpu_custom_call.1} parent=1 // loop_footer_branch
      %18 = sbr.rel target = $region7
    $region12: #{tpu_custom_call.1} parent=1 // loop_exit
      _
    loop: start=0, step=1, limit=8
    $region17: #{tpu_custom_call.1} parent=1 // loop_pre_header
      _
    $region18: #{tpu_custom_call.1} parent=1 // loop_header
      %s41 = sphi 0, %s45
      %p42 = scmp.ge.s32.totalorder %s41, 8
    $region19: #{tpu_custom_call.1} parent=1 // loop_header_branch
      %44 = sbr.rel (%p42) target = $region23
    $region20: #{tpu_custom_call.1} parent=1 // loop_body
      %s46 = smul.u32 1, 1
      %s47 = sshll.u32 %s46, 4
      %48 = dma.done [#allocation3], %s47
    $region21: #{tpu_custom_call.1} parent=1 // loop_footer
      %s45 = sadd.s32 1, %s41
    $region22: #{tpu_custom_call.1} parent=1 // loop_footer_branch
      %40 = sbr.rel target = $region18
    $region23: #{tpu_custom_call.1} parent=1 // loop_exit
      _
    %v49 = vld [vmem:[#allocation2] sm:$0xff]
    %v50 = vld [vmem:[%s2] sm:$0xff]
    %52 = vset.pattern.permute.xlu0 0
    %53 = vperm.xlu0 %52, %v50
    %v54 = vpop.permute.xlu0 %53
    %v56 = vmul.f32 %v49, %v54
    %57 = vst [vmem:[#allocation6] sm:$0xff] %v56
    // Predicated region
    $region24: #{tpu_custom_call.1} parent=1 // pred_check
      _
    $region25: #{tpu_custom_call.1} parent=1 // pred_check_branch
      %59 = sbr.rel (0) target = $region27
    $region26: #{tpu_custom_call.1} parent=1 // pred_region
      %s61 = ssub.s32 128, 128
      %62 = vsyncadd [#allocation7], %s61
      %s64 = sshll.u32 [#allocation6], 4
      %s65 = int_to_ptr.vmem [resolvable:$true] %s64
      %67 = dma.vmem_to_hbm [thread:$0]  %s65, 128, %s3, [#allocation7]
    $region27: #{tpu_custom_call.1} parent=1 // pred_fallthru
      _
    // Predicated region
    $region28: #{tpu_custom_call.1} parent=1 // pred_check
      _
    $region29: #{tpu_custom_call.1} parent=1 // pred_check_branch
      %69 = sbr.rel (0) target = $region31
    $region30: #{tpu_custom_call.1} parent=1 // pred_region
      %70 = dma.done [#allocation7], 128
    $region31: #{tpu_custom_call.1} parent=1 // pred_fallthru
      _
    %71 = vsyncpa [#allocation7], 1
  %72 = vsyncmov [#allocation3]
  %s73 = vpop.sfrf %72
  %p74 = scmp.eq.s32.totalorder %s73, 0
  %p75 = pneg %p74
  %77 = shalt.err (%p75)

</llo_original>
